<compile_context>
chip_gen: v7x
topology: tpu7x:2x2x1
jax: 0.10.0
libtpu: 0.0.40
codegen_flags: <defaults>
</compile_context>

<pallas_src>
import functools

import jax
import jax.numpy as jnp
from jax.experimental import pallas as pl
from jax.experimental.pallas import tpu as pltpu


# Packed output layout (lane-dense, width = multiple of 128).
PACK_W = 128
_COL_VALUE = 0      # critic value
_COL_MODE_LOGP = 1  # log_prob(mode action)
_COL_MODE_ACT = 2   # mode action (exact small integer stored as f32)
_COL_ENTROPY = 3    # per-row entropy
_COL_EVAL_LOGP = 4  # log_prob(externally supplied action)  (evaluate_actions)


def _round_up(x, m):
    return ((x + m - 1) // m) * m


def _choose_tile_b(batch, max_tile=256):
    """Pick a batch tile: big enough to amortize per-step pipeline overhead and
    fill the MXU M-dim, multiple of 16 (bf16 sublane packing), and for large
    batches an even grid length >= 2 so v7x's two TensorCores both run."""
    b16 = _round_up(batch, 16)
    if b16 <= max_tile:
        return b16                       # single grid step covers the batch
    n_steps = max(2, _round_up(-(-b16 // max_tile), 2))   # even, >= 2
    return _round_up(-(-b16 // n_steps), 16)


# ---------------------------------------------------------------------------
# Fused Pallas kernel: backbone + actor/critic heads + categorical math
# ---------------------------------------------------------------------------
def _policy_fused_kernel(obs_ref, rnn_ref, prev_ref, eval_act_ref, masks_ref,
                         w_obs_ref, w_h_ref, w_prev_ref, b_net_ref,
                         w_heads_ref, b_heads_ref,
                         packed_ref, feat_ref, *, dim_actions):
    tile_b = obs_ref.shape[0]
    A = dim_actions

    # ---- backbone: feat = tanh(obs@W_obs + (h*mask)@W_h + onehot(prev)@W_prev + b)
    masks = masks_ref[...]                                             # [T,1] f32
    h = (rnn_ref[...].astype(jnp.float32) * masks).astype(jnp.bfloat16)
    col_a = jax.lax.broadcasted_iota(jnp.int32, (tile_b, A), 1)
    prev_onehot = (col_a == prev_ref[...]).astype(jnp.bfloat16)        # [T,A]

    pre = (jnp.dot(obs_ref[...], w_obs_ref[...],
                   preferred_element_type=jnp.float32)
           + jnp.dot(h, w_h_ref[...], preferred_element_type=jnp.float32)
           + jnp.dot(prev_onehot, w_prev_ref[...],
                     preferred_element_type=jnp.float32)
           + b_net_ref[...])                                           # [T,H_pad] f32
    feat = jnp.tanh(pre)
    feat_bf = feat.astype(jnp.bfloat16)
    feat_ref[...] = feat_bf                                            # bf16, 128-lane aligned

    # ---- fused heads: [logits | value] = feat @ [W_act | W_crit] + [b_act | b_crit]
    hl = jnp.dot(feat_bf, w_heads_ref[...],
                 preferred_element_type=jnp.float32) + b_heads_ref[...]  # [T,A+1]
    logits = hl[:, :A]
    value = hl[:, A:A + 1]

    # ---- categorical distribution math (f32 on VPU/EUP), exp reuse
    m = jnp.max(logits, axis=-1, keepdims=True)                        # [T,1]
    z = logits - m
    e = jnp.exp(z)                                                     # [T,A]
    s = jnp.sum(e, axis=-1, keepdims=True)                             # [T,1]
    logp = z - jnp.log(s)                                              # [T,A]
    p = e * pl.reciprocal(s, approx=True)                              # [T,A]

    # mode() = first maximal index (torch.argmax semantics)
    is_max = logits == m
    mode_act = jnp.min(jnp.where(is_max, col_a, A), axis=-1,
                       keepdims=True)                                  # [T,1] i32
    mode_act_f = mode_act.astype(jnp.float32)                          # exact small int
    mode_logp = jnp.sum(jnp.where(col_a == mode_act, logp, 0.0),
                        axis=-1, keepdims=True)                        # [T,1]
    eval_logp = jnp.sum(jnp.where(col_a == eval_act_ref[...], logp, 0.0),
                        axis=-1, keepdims=True)                        # [T,1]
    entropy = -jnp.sum(p * logp, axis=-1, keepdims=True)               # [T,1]

    # ---- single lane-dense packed writeback, built with pure-VPU iota selects
    col = jax.lax.broadcasted_iota(jnp.int32, (tile_b, PACK_W), 1)
    zero = jnp.zeros((tile_b, PACK_W), jnp.float32)
    packed = jnp.where(col == _COL_VALUE, value, zero)
    packed = packed + jnp.where(col == _COL_MODE_LOGP, mode_logp, zero)
    packed = packed + jnp.where(col == _COL_MODE_ACT, mode_act_f, zero)
    packed = packed + jnp.where(col == _COL_ENTROPY, entropy, zero)
    packed = packed + jnp.where(col == _COL_EVAL_LOGP, eval_logp, zero)
    packed_ref[...] = packed


# ---------------------------------------------------------------------------
# One-time parameter preparation (hoisted out of the per-call hot path)
# ---------------------------------------------------------------------------
def prepare_policy_params(params):
    d_obs, H = params["w_obs"].shape
    A = params["w_act"].shape[1]
    H_pad = _round_up(H, 128)
    ph = H_pad - H
    w_obs = jnp.pad(params["w_obs"], ((0, 0), (0, ph))).astype(jnp.bfloat16)
    w_h = jnp.pad(params["w_h"], ((0, ph), (0, ph))).astype(jnp.bfloat16)
    w_prev = jnp.pad(params["w_prev"], ((0, 0), (0, ph))).astype(jnp.bfloat16)
    b_net = jnp.pad(params["b_net"], (0, ph)).reshape(1, H_pad).astype(jnp.float32)
    w_heads = jnp.pad(
        jnp.concatenate([params["w_act"], params["w_crit"]], axis=1),
        ((0, ph), (0, 0))).astype(jnp.bfloat16)
    b_heads = jnp.concatenate(
        [params["b_act"], params["b_crit"]]).reshape(1, A + 1).astype(jnp.float32)
    return {
        "w_obs": w_obs, "w_h": w_h, "w_prev": w_prev, "b_net": b_net,
        "w_heads": w_heads, "b_heads": b_heads,
        "d_obs": d_obs, "hidden": H, "hidden_pad": H_pad, "dim_actions": A,
    }


# ---------------------------------------------------------------------------
# Wrapper: tiling over batch, VMEM budgeting, lane-dense output unpacking
# ---------------------------------------------------------------------------
def _policy_fused_call(prep, observations, rnn_hidden_states, prev_actions,
                       masks, eval_actions=None):
    B = observations.shape[0]
    d_obs = prep["d_obs"]
    H = prep["hidden"]
    H_pad = prep["hidden_pad"]
    A = prep["dim_actions"]

    if eval_actions is None:
        eval_actions = jnp.zeros((B, 1), jnp.int32)

    tile_b = _choose_tile_b(B)
    b_pad = _round_up(B, tile_b)
    pb = b_pad - B
    ph = H_pad - H

    obs = jnp.pad(observations.astype(jnp.bfloat16), ((0, pb), (0, 0)))
    rnn = jnp.pad(rnn_hidden_states.astype(jnp.bfloat16), ((0, pb), (0, ph)))
    prev = jnp.pad(prev_actions.astype(jnp.int32), ((0, pb), (0, 0)))
    evala = jnp.pad(eval_actions.astype(jnp.int32), ((0, pb), (0, 0)))
    msk = jnp.pad(masks.astype(jnp.float32), ((0, pb), (0, 0)))

    grid = (b_pad // tile_b,)

    # ---- cost estimate / VMEM budget (portable to v7x 64 MiB, v5e 16 MiB scoped)
    flops = 2 * b_pad * H_pad * (d_obs + H_pad + A + (A + 1))
    transcendentals = b_pad * (H_pad + A + 2)
    weight_bytes = ((d_obs + H_pad + A + (A + 1)) * H_pad * 2
                    + (H_pad + A + 1) * 4)
    in_tile_bytes = tile_b * (d_obs * 2 + H_pad * 2 + 3 * 4)
    out_tile_bytes = tile_b * (PACK_W * 4 + H_pad * 2)
    bytes_accessed = (b_pad * (d_obs * 2 + H_pad * 2 + 3 * 4)
                      + weight_bytes + b_pad * (PACK_W * 4 + H_pad * 2))
    vmem_est = (2 * (in_tile_bytes + out_tile_bytes + weight_bytes)
                + 8 * tile_b * H_pad * 4)            # f32 intermediates headroom
    vmem_limit = int(min(64 << 20, max(2 * vmem_est, 16 << 20)))

    packed, feats = pl.pallas_call(
        functools.partial(_policy_fused_kernel, dim_actions=A),
        out_shape=(
            jax.ShapeDtypeStruct((b_pad, PACK_W), jnp.float32),
            jax.ShapeDtypeStruct((b_pad, H_pad), jnp.bfloat16),
        ),
        grid_spec=pltpu.PrefetchScalarGridSpec(
            num_scalar_prefetch=0,
            grid=grid,
            in_specs=[
                pl.BlockSpec((tile_b, d_obs), lambda i: (i, 0)),   # obs
                pl.BlockSpec((tile_b, H_pad), lambda i: (i, 0)),   # rnn hidden
                pl.BlockSpec((tile_b, 1), lambda i: (i, 0)),       # prev actions
                pl.BlockSpec((tile_b, 1), lambda i: (i, 0)),       # eval actions
                pl.BlockSpec((tile_b, 1), lambda i: (i, 0)),       # masks
                pl.BlockSpec((d_obs, H_pad), lambda i: (0, 0)),    # W_obs (resident)
                pl.BlockSpec((H_pad, H_pad), lambda i: (0, 0)),    # W_h (resident)
                pl.BlockSpec((A, H_pad), lambda i: (0, 0)),        # W_prev (resident)
                pl.BlockSpec((1, H_pad), lambda i: (0, 0)),        # b_net
                pl.BlockSpec((H_pad, A + 1), lambda i: (0, 0)),    # W_heads (resident)
                pl.BlockSpec((1, A + 1), lambda i: (0, 0)),        # b_heads
            ],
            out_specs=(
                pl.BlockSpec((tile_b, PACK_W), lambda i: (i, 0)),  # packed results
                pl.BlockSpec((tile_b, H_pad), lambda i: (i, 0)),   # new hidden (bf16)
            ),
        ),
        compiler_params=pltpu.CompilerParams(
            dimension_semantics=("parallel",),
            vmem_limit_bytes=vmem_limit),
        cost_estimate=pl.CostEstimate(
            flops=flops, transcendentals=transcendentals,
            bytes_accessed=bytes_accessed),
    )(obs, rnn, prev, evala, msk,
      prep["w_obs"], prep["w_h"], prep["w_prev"], prep["b_net"],
      prep["w_heads"], prep["b_heads"])

    # Recurrent state is computed/stored in bf16 (documented rounding on the
    # recurrent path); cast back to f32 for the Policy API.
    return packed[:B], feats[:B, :H].astype(jnp.float32)


# ---------------------------------------------------------------------------
# Policy-like API (act / get_value / evaluate_actions)
# ---------------------------------------------------------------------------
def policy_act(prep, observations, rnn_hidden_states, prev_actions, masks,
               deterministic=True):
    # TODO(synk): distribution.sample() (deterministic=False) is not implemented;
    # only the deterministic mode() path is reproduced.
    packed, new_hidden = _policy_fused_call(
        prep, observations, rnn_hidden_states, prev_actions, masks)
    value = packed[:, _COL_VALUE:_COL_VALUE + 1]
    action = packed[:, _COL_MODE_ACT:_COL_MODE_ACT + 1].astype(jnp.int32)
    action_log_probs = packed[:, _COL_MODE_LOGP:_COL_MODE_LOGP + 1]
    return value, action, action_log_probs, new_hidden


def policy_get_value(prep, observations, rnn_hidden_states, prev_actions,
                     masks):
    packed, _ = _policy_fused_call(
        prep, observations, rnn_hidden_states, prev_actions, masks)
    return packed[:, _COL_VALUE:_COL_VALUE + 1]


def policy_evaluate_actions(prep, observations, rnn_hidden_states,
                            prev_actions, masks, action):
    B = observations.shape[0]
    packed, new_hidden = _policy_fused_call(
        prep, observations, rnn_hidden_states, prev_actions, masks,
        eval_actions=action)
    value = packed[:, _COL_VALUE:_COL_VALUE + 1]
    action_log_probs = packed[:, _COL_EVAL_LOGP:_COL_EVAL_LOGP + 1]
    entropy = jnp.sum(packed[:, _COL_ENTROPY]) / B
    return value, action_log_probs, entropy, new_hidden


# ---------------------------------------------------------------------------
# Pure-JAX reference (for correctness check) and parameter construction
# ---------------------------------------------------------------------------
def _reference(params, obs, rnn, prev, masks):
    # TODO(synk): `net` is an external abstract module in the original Policy;
    # this minimal linear+tanh feature extractor stands in for it.
    A = params["w_act"].shape[1]
    h = rnn * masks
    a = jax.nn.one_hot(prev[:, 0], A, dtype=jnp.float32)
    feat = jnp.tanh(obs @ params["w_obs"] + h @ params["w_h"]
                    + a @ params["w_prev"] + params["b_net"])
    logits = feat @ params["w_act"] + params["b_act"]
    value = feat @ params["w_crit"] + params["b_crit"]
    logp = jax.nn.log_softmax(logits, axis=-1)
    entropy = jnp.mean(-jnp.sum(jnp.exp(logp) * logp, axis=-1))
    return value, logp, entropy, feat


def make_params(key, d_obs, hidden, dim_actions):
    k = jax.random.split(key, 6)
    ortho = jax.nn.initializers.orthogonal()
    return {
        # synthetic backbone
        "w_obs": jax.random.normal(k[0], (d_obs, hidden), jnp.float32) * 0.05,
        "w_h": jax.random.normal(k[1], (hidden, hidden), jnp.float32) * 0.05,
        "w_prev": jax.random.normal(k[2], (dim_actions, hidden), jnp.float32) * 0.05,
        "b_net": jnp.zeros((hidden,), jnp.float32),
        # CategoricalNet linear (orthogonal init, zero bias)
        "w_act": ortho(k[3], (hidden, dim_actions), jnp.float32) * 0.01,
        "b_act": jnp.zeros((dim_actions,), jnp.float32),
        # CriticHead linear (orthogonal init, zero bias)
        "w_crit": ortho(k[4], (hidden, 1), jnp.float32),
        "b_crit": jnp.zeros((1,), jnp.float32),
    }


if __name__ == "__main__":
    B, D_OBS, HIDDEN, DIM_ACTIONS = 8, 16, 32, 4

    key = jax.random.PRNGKey(0)
    kp, ko, kh = jax.random.split(key, 3)
    params = make_params(kp, D_OBS, HIDDEN, DIM_ACTIONS)
    prep = prepare_policy_params(params)       # one-time weight fusion/padding

    observations = jax.random.normal(ko, (B, D_OBS), jnp.float32)
    rnn_hidden_states = jax.random.normal(kh, (B, HIDDEN), jnp.float32)
    prev_actions = jnp.zeros((B, 1), jnp.int32)
    masks = jnp.ones((B, 1), jnp.float32)
    given_actions = jnp.arange(B, dtype=jnp.int32).reshape(B, 1) % DIM_ACTIONS

    value, action, action_log_probs, new_hidden = policy_act(
        prep, observations, rnn_hidden_states, prev_actions, masks,
        deterministic=True)
    v2, alp2, ent, _ = policy_evaluate_actions(
        prep, observations, rnn_hidden_states, prev_actions, masks,
        given_actions)
    v3 = policy_get_value(prep, observations, rnn_hidden_states,
                          prev_actions, masks)

    jax.block_until_ready((value, action, action_log_probs, new_hidden,
                           v2, alp2, ent, v3))

    # shape / dtype checks
    assert value.shape == (B, 1) and value.dtype == jnp.float32
    assert action.shape == (B, 1) and action.dtype == jnp.int32
    assert action_log_probs.shape == (B, 1)
    assert new_hidden.shape == (B, HIDDEN)
    assert v2.shape == (B, 1) and alp2.shape == (B, 1) and ent.shape == ()

    # numeric check against pure-JAX reference (loose tolerance: bf16 matmuls)
    ref_value, ref_logp, ref_entropy, ref_feat = _reference(
        params, observations, rnn_hidden_states, prev_actions, masks)
    ref_alp2 = jnp.take_along_axis(ref_logp, given_actions, axis=-1)
    ref_action = jnp.argmax(ref_logp, axis=-1, keepdims=True).astype(jnp.int32)
    assert jnp.allclose(value, ref_value, atol=5e-2, rtol=5e-2)
    assert jnp.allclose(new_hidden, ref_feat, atol=5e-2, rtol=5e-2)
    assert jnp.allclose(alp2, ref_alp2, atol=5e-2, rtol=5e-2)
    assert jnp.allclose(ent, ref_entropy, atol=5e-2, rtol=5e-2)
    assert jnp.array_equal(action, ref_action)

    print("KERNEL_OK")
</pallas_src>

<mosaic_0001>
module attributes {stable_mosaic.version = 11 : i64} {
  func.func @_policy_fused_kernel(%arg0: i32, %arg1: memref<16x16xbf16, #tpu.memory_space<vmem>>, %arg2: memref<16x128xbf16, #tpu.memory_space<vmem>>, %arg3: memref<16x1xi32, #tpu.memory_space<vmem>>, %arg4: memref<16x1xi32, #tpu.memory_space<vmem>>, %arg5: memref<16x1xf32, #tpu.memory_space<vmem>>, %arg6: memref<16x128xbf16, #tpu.memory_space<vmem>>, %arg7: memref<128x128xbf16, #tpu.memory_space<vmem>>, %arg8: memref<4x128xbf16, #tpu.memory_space<vmem>>, %arg9: memref<1x128xf32, #tpu.memory_space<vmem>>, %arg10: memref<128x5xbf16, #tpu.memory_space<vmem>>, %arg11: memref<1x5xf32, #tpu.memory_space<vmem>>, %arg12: memref<16x128xf32, #tpu.memory_space<vmem>>, %arg13: memref<16x128xbf16, #tpu.memory_space<vmem>>) attributes {dimension_semantics = [#tpu.dimension_semantics<parallel>], iteration_bounds = array<i64: 1>, scalar_prefetch = 0 : i64, scratch_operands = 0 : i64, tpu.core_type = #tpu.core_type<tc>, window_params = [{transform_indices = @transform_0, window_bounds = array<i64: 16, 16>}, {transform_indices = @transform_1, window_bounds = array<i64: 16, 128>}, {transform_indices = @transform_2, window_bounds = array<i64: 16, 1>}, {transform_indices = @transform_3, window_bounds = array<i64: 16, 1>}, {transform_indices = @transform_4, window_bounds = array<i64: 16, 1>}, {pipeline_mode = #tpu.pipeline_mode<synchronous>, transform_indices = @transform_5, window_bounds = array<i64: 16, 128>}, {pipeline_mode = #tpu.pipeline_mode<synchronous>, transform_indices = @transform_6, window_bounds = array<i64: 128, 128>}, {pipeline_mode = #tpu.pipeline_mode<synchronous>, transform_indices = @transform_7, window_bounds = array<i64: 4, 128>}, {pipeline_mode = #tpu.pipeline_mode<synchronous>, transform_indices = @transform_8, window_bounds = array<i64: 1, 128>}, {pipeline_mode = #tpu.pipeline_mode<synchronous>, transform_indices = @transform_9, window_bounds = array<i64: 128, 5>}, {pipeline_mode = #tpu.pipeline_mode<synchronous>, transform_indices = @transform_10, window_bounds = array<i64: 1, 5>}, {transform_indices = @transform_11, window_bounds = array<i64: 16, 128>}, {transform_indices = @transform_12, window_bounds = array<i64: 16, 128>}]} {
    %c0 = arith.constant 0 : index
    %c0_0 = arith.constant 0 : index
    %0 = vector.load %arg5[%c0, %c0_0] : memref<16x1xf32, #tpu.memory_space<vmem>>, vector<16x1xf32>
    %c0_1 = arith.constant 0 : index
    %c0_2 = arith.constant 0 : index
    %1 = vector.load %arg2[%c0_1, %c0_2] : memref<16x128xbf16, #tpu.memory_space<vmem>>, vector<16x128xbf16>
    %2 = arith.extf %1 : vector<16x128xbf16> to vector<16x128xf32>
    %3 = vector.broadcast %0 : vector<16x1xf32> to vector<16x128xf32>
    %4 = arith.mulf %2, %3 : vector<16x128xf32>
    %5 = arith.truncf %4 : vector<16x128xf32> to vector<16x128xbf16>
    %6 = tpu.iota {dimensions = array<i32: 1>} : vector<16x4xi32>
    %c0_3 = arith.constant 0 : index
    %c0_4 = arith.constant 0 : index
    %7 = vector.load %arg3[%c0_3, %c0_4] : memref<16x1xi32, #tpu.memory_space<vmem>>, vector<16x1xi32>
    %8 = vector.broadcast %7 : vector<16x1xi32> to vector<16x4xi32>
    %9 = arith.cmpi eq, %6, %8 : vector<16x4xi32>
    %10 = arith.extui %9 : vector<16x4xi1> to vector<16x4xi32>
    %11 = arith.sitofp %10 : vector<16x4xi32> to vector<16x4xf32>
    %12 = arith.truncf %11 : vector<16x4xf32> to vector<16x4xbf16>
    %c0_5 = arith.constant 0 : index
    %c0_6 = arith.constant 0 : index
    %13 = vector.load %arg1[%c0_5, %c0_6] : memref<16x16xbf16, #tpu.memory_space<vmem>>, vector<16x16xbf16>
    %c0_7 = arith.constant 0 : index
    %c0_8 = arith.constant 0 : index
    %14 = vector.load %arg6[%c0_7, %c0_8] : memref<16x128xbf16, #tpu.memory_space<vmem>>, vector<16x128xbf16>
    %cst = arith.constant dense<0.000000e+00> : vector<16x128xf32>
    %15 = tpu.matmul %13, %14, %cst {dimension_numbers = #tpu.dot_dimension_numbers<[1], [0], [0], [1], [0, 0, 1, 1], [], []>} : vector<16x16xbf16>, vector<16x128xbf16>, vector<16x128xf32> -> vector<16x128xf32>
    %c0_9 = arith.constant 0 : index
    %c0_10 = arith.constant 0 : index
    %16 = vector.load %arg7[%c0_9, %c0_10] : memref<128x128xbf16, #tpu.memory_space<vmem>>, vector<128x128xbf16>
    %cst_11 = arith.constant dense<0.000000e+00> : vector<16x128xf32>
    %17 = tpu.matmul %5, %16, %cst_11 {dimension_numbers = #tpu.dot_dimension_numbers<[1], [0], [0], [1], [0, 0, 1, 1], [], []>} : vector<16x128xbf16>, vector<128x128xbf16>, vector<16x128xf32> -> vector<16x128xf32>
    %18 = arith.addf %15, %17 : vector<16x128xf32>
    %c0_12 = arith.constant 0 : index
    %c0_13 = arith.constant 0 : index
    %19 = vector.load %arg8[%c0_12, %c0_13] : memref<4x128xbf16, #tpu.memory_space<vmem>>, vector<4x128xbf16>
    %cst_14 = arith.constant dense<0.000000e+00> : vector<16x128xf32>
    %20 = tpu.matmul %12, %19, %cst_14 {dimension_numbers = #tpu.dot_dimension_numbers<[1], [0], [0], [1], [0, 0, 1, 1], [], []>} : vector<16x4xbf16>, vector<4x128xbf16>, vector<16x128xf32> -> vector<16x128xf32>
    %21 = arith.addf %18, %20 : vector<16x128xf32>
    %c0_15 = arith.constant 0 : index
    %c0_16 = arith.constant 0 : index
    %22 = vector.load %arg9[%c0_15, %c0_16] : memref<1x128xf32, #tpu.memory_space<vmem>>, vector<1x128xf32>
    %23 = vector.broadcast %22 : vector<1x128xf32> to vector<16x128xf32>
    %24 = arith.addf %21, %23 : vector<16x128xf32>
    %25 = math.tanh %24 : vector<16x128xf32>
    %26 = arith.truncf %25 : vector<16x128xf32> to vector<16x128xbf16>
    %c0_17 = arith.constant 0 : index
    %c0_18 = arith.constant 0 : index
    %27 = vector.load %arg13[%c0_17, %c0_18] : memref<16x128xbf16, #tpu.memory_space<vmem>>, vector<16x128xbf16>
    tpu.vector_store %arg13[%c0_17, %c0_18], %26 {strides = array<i32>} : memref<16x128xbf16, #tpu.memory_space<vmem>>, vector<16x128xbf16>,
    %c0_19 = arith.constant 0 : index
    %c0_20 = arith.constant 0 : index
    %28 = vector.load %arg10[%c0_19, %c0_20] : memref<128x5xbf16, #tpu.memory_space<vmem>>, vector<128x5xbf16>
    %cst_21 = arith.constant dense<0.000000e+00> : vector<16x5xf32>
    %29 = tpu.matmul %26, %28, %cst_21 {dimension_numbers = #tpu.dot_dimension_numbers<[1], [0], [0], [1], [0, 0, 1, 1], [], []>} : vector<16x128xbf16>, vector<128x5xbf16>, vector<16x5xf32> -> vector<16x5xf32>
    %c0_22 = arith.constant 0 : index
    %c0_23 = arith.constant 0 : index
    %30 = vector.load %arg11[%c0_22, %c0_23] : memref<1x5xf32, #tpu.memory_space<vmem>>, vector<1x5xf32>
    %31 = vector.broadcast %30 : vector<1x5xf32> to vector<16x5xf32>
    %32 = arith.addf %29, %31 : vector<16x5xf32>
    %33 = vector.extract_strided_slice %32 {offsets = [0, 0], sizes = [16, 4], strides = [1, 1]} : vector<16x5xf32> to vector<16x4xf32>
    %34 = vector.extract_strided_slice %32 {offsets = [0, 4], sizes = [16, 1], strides = [1, 1]} : vector<16x5xf32> to vector<16x1xf32>
    %cst_24 = arith.constant dense<0xFF800000> : vector<16xf32>
    %35 = vector.multi_reduction <maximumf>, %33, %cst_24 [1] : vector<16x4xf32> to vector<16xf32>
    %36 = vector.shape_cast %35 : vector<16xf32> to vector<16x1xf32>
    %37 = vector.broadcast %36 : vector<16x1xf32> to vector<16x4xf32>
    %38 = arith.subf %33, %37 : vector<16x4xf32>
    %39 = math.exp %38 : vector<16x4xf32>
    %cst_25 = arith.constant dense<0.000000e+00> : vector<16xf32>
    %40 = vector.multi_reduction <add>, %39, %cst_25 [1] : vector<16x4xf32> to vector<16xf32>
    %41 = vector.shape_cast %40 : vector<16xf32> to vector<16x1xf32>
    %42 = math.log %41 : vector<16x1xf32>
    %43 = vector.broadcast %42 : vector<16x1xf32> to vector<16x4xf32>
    %44 = arith.subf %38, %43 : vector<16x4xf32>
    %45 = tpu.reciprocal %41 {approx = true} : vector<16x1xf32> -> vector<16x1xf32>
    %46 = vector.broadcast %45 : vector<16x1xf32> to vector<16x4xf32>
    %47 = arith.mulf %39, %46 : vector<16x4xf32>
    %48 = vector.broadcast %36 : vector<16x1xf32> to vector<16x4xf32>
    %49 = arith.cmpf oeq, %33, %48 : vector<16x4xf32>
    %c4_i32 = arith.constant 4 : i32
    %50 = vector.broadcast %c4_i32 : i32 to vector<16x4xi32>
    %51 = arith.select %49, %6, %50 : vector<16x4xi1>, vector<16x4xi32>
    %cst_26 = arith.constant dense<2147483647> : vector<16xi32>
    %52 = vector.multi_reduction <minsi>, %51, %cst_26 [1] : vector<16x4xi32> to vector<16xi32>
    %53 = vector.shape_cast %52 : vector<16xi32> to vector<16x1xi32>
    %54 = arith.sitofp %53 : vector<16x1xi32> to vector<16x1xf32>
    %55 = vector.broadcast %53 : vector<16x1xi32> to vector<16x4xi32>
    %56 = arith.cmpi eq, %6, %55 : vector<16x4xi32>
    %cst_27 = arith.constant 0.000000e+00 : f32
    %57 = vector.broadcast %cst_27 : f32 to vector<16x4xf32>
    %58 = arith.select %56, %44, %57 : vector<16x4xi1>, vector<16x4xf32>
    %cst_28 = arith.constant dense<0.000000e+00> : vector<16xf32>
    %59 = vector.multi_reduction <add>, %58, %cst_28 [1] : vector<16x4xf32> to vector<16xf32>
    %60 = vector.shape_cast %59 : vector<16xf32> to vector<16x1xf32>
    %c0_29 = arith.constant 0 : index
    %c0_30 = arith.constant 0 : index
    %61 = vector.load %arg4[%c0_29, %c0_30] : memref<16x1xi32, #tpu.memory_space<vmem>>, vector<16x1xi32>
    %62 = vector.broadcast %61 : vector<16x1xi32> to vector<16x4xi32>
    %63 = arith.cmpi eq, %6, %62 : vector<16x4xi32>
    %cst_31 = arith.constant 0.000000e+00 : f32
    %64 = vector.broadcast %cst_31 : f32 to vector<16x4xf32>
    %65 = arith.select %63, %44, %64 : vector<16x4xi1>, vector<16x4xf32>
    %cst_32 = arith.constant dense<0.000000e+00> : vector<16xf32>
    %66 = vector.multi_reduction <add>, %65, %cst_32 [1] : vector<16x4xf32> to vector<16xf32>
    %67 = vector.shape_cast %66 : vector<16xf32> to vector<16x1xf32>
    %68 = arith.mulf %47, %44 : vector<16x4xf32>
    %cst_33 = arith.constant dense<0.000000e+00> : vector<16xf32>
    %69 = vector.multi_reduction <add>, %68, %cst_33 [1] : vector<16x4xf32> to vector<16xf32>
    %70 = vector.shape_cast %69 : vector<16xf32> to vector<16x1xf32>
    %cst_34 = arith.constant 0.000000e+00 : f32
    %71 = vector.broadcast %cst_34 : f32 to vector<16x1xf32>
    %72 = arith.subf %71, %70 : vector<16x1xf32>
    %73 = tpu.iota {dimensions = array<i32: 1>} : vector<16x128xi32>
    %cst_35 = arith.constant 0.000000e+00 : f32
    %74 = vector.broadcast %cst_35 : f32 to vector<16x128xf32>
    %c0_i32 = arith.constant 0 : i32
    %75 = vector.broadcast %c0_i32 : i32 to vector<16x128xi32>
    %76 = arith.cmpi eq, %73, %75 : vector<16x128xi32>
    %77 = vector.shape_cast %34 : vector<16x1xf32> to vector<16x1xf32>
    %78 = vector.broadcast %77 : vector<16x1xf32> to vector<16x128xf32>
    %79 = arith.select %76, %78, %74 : vector<16x128xi1>, vector<16x128xf32>
    %c1_i32 = arith.constant 1 : i32
    %80 = vector.broadcast %c1_i32 : i32 to vector<16x128xi32>
    %81 = arith.cmpi eq, %73, %80 : vector<16x128xi32>
    %82 = vector.shape_cast %60 : vector<16x1xf32> to vector<16x1xf32>
    %83 = vector.broadcast %82 : vector<16x1xf32> to vector<16x128xf32>
    %84 = arith.select %81, %83, %74 : vector<16x128xi1>, vector<16x128xf32>
    %85 = arith.addf %79, %84 : vector<16x128xf32>
    %c2_i32 = arith.constant 2 : i32
    %86 = vector.broadcast %c2_i32 : i32 to vector<16x128xi32>
    %87 = arith.cmpi eq, %73, %86 : vector<16x128xi32>
    %88 = vector.shape_cast %54 : vector<16x1xf32> to vector<16x1xf32>
    %89 = vector.broadcast %88 : vector<16x1xf32> to vector<16x128xf32>
    %90 = arith.select %87, %89, %74 : vector<16x128xi1>, vector<16x128xf32>
    %91 = arith.addf %85, %90 : vector<16x128xf32>
    %c3_i32 = arith.constant 3 : i32
    %92 = vector.broadcast %c3_i32 : i32 to vector<16x128xi32>
    %93 = arith.cmpi eq, %73, %92 : vector<16x128xi32>
    %94 = vector.shape_cast %72 : vector<16x1xf32> to vector<16x1xf32>
    %95 = vector.broadcast %94 : vector<16x1xf32> to vector<16x128xf32>
    %96 = arith.select %93, %95, %74 : vector<16x128xi1>, vector<16x128xf32>
    %97 = arith.addf %91, %96 : vector<16x128xf32>
    %c4_i32_36 = arith.constant 4 : i32
    %98 = vector.broadcast %c4_i32_36 : i32 to vector<16x128xi32>
    %99 = arith.cmpi eq, %73, %98 : vector<16x128xi32>
    %100 = vector.shape_cast %67 : vector<16x1xf32> to vector<16x1xf32>
    %101 = vector.broadcast %100 : vector<16x1xf32> to vector<16x128xf32>
    %102 = arith.select %99, %101, %74 : vector<16x128xi1>, vector<16x128xf32>
    %103 = arith.addf %97, %102 : vector<16x128xf32>
    %c0_37 = arith.constant 0 : index
    %c0_38 = arith.constant 0 : index
    %104 = vector.load %arg12[%c0_37, %c0_38] : memref<16x128xf32, #tpu.memory_space<vmem>>, vector<16x128xf32>
    tpu.vector_store %arg12[%c0_37, %c0_38], %103 {strides = array<i32>} : memref<16x128xf32, #tpu.memory_space<vmem>>, vector<16x128xf32>,
    return
  }
  func.func @transform_0(%arg0: i32) -> (i32, i32) {
    %c0_i32 = arith.constant 0 : i32
    %c0_i32_0 = arith.constant 0 : i32
    return %arg0, %c0_i32 : i32, i32
  }
  func.func @transform_1(%arg0: i32) -> (i32, i32) {
    %c0_i32 = arith.constant 0 : i32
    %c0_i32_0 = arith.constant 0 : i32
    return %arg0, %c0_i32 : i32, i32
  }
  func.func @transform_2(%arg0: i32) -> (i32, i32) {
    %c0_i32 = arith.constant 0 : i32
    %c0_i32_0 = arith.constant 0 : i32
    return %arg0, %c0_i32 : i32, i32
  }
  func.func @transform_3(%arg0: i32) -> (i32, i32) {
    %c0_i32 = arith.constant 0 : i32
    %c0_i32_0 = arith.constant 0 : i32
    return %arg0, %c0_i32 : i32, i32
  }
  func.func @transform_4(%arg0: i32) -> (i32, i32) {
    %c0_i32 = arith.constant 0 : i32
    %c0_i32_0 = arith.constant 0 : i32
    return %arg0, %c0_i32 : i32, i32
  }
  func.func @transform_5(%arg0: i32) -> (i32, i32) {
    %c0_i32 = arith.constant 0 : i32
    %c0_i32_0 = arith.constant 0 : i32
    %c0_i32_1 = arith.constant 0 : i32
    return %c0_i32, %c0_i32_0 : i32, i32
  }
  func.func @transform_6(%arg0: i32) -> (i32, i32) {
    %c0_i32 = arith.constant 0 : i32
    %c0_i32_0 = arith.constant 0 : i32
    %c0_i32_1 = arith.constant 0 : i32
    return %c0_i32, %c0_i32_0 : i32, i32
  }
  func.func @transform_7(%arg0: i32) -> (i32, i32) {
    %c0_i32 = arith.constant 0 : i32
    %c0_i32_0 = arith.constant 0 : i32
    %c0_i32_1 = arith.constant 0 : i32
    return %c0_i32, %c0_i32_0 : i32, i32
  }
  func.func @transform_8(%arg0: i32) -> (i32, i32) {
    %c0_i32 = arith.constant 0 : i32
    %c0_i32_0 = arith.constant 0 : i32
    %c0_i32_1 = arith.constant 0 : i32
    return %c0_i32, %c0_i32_0 : i32, i32
  }
  func.func @transform_9(%arg0: i32) -> (i32, i32) {
    %c0_i32 = arith.constant 0 : i32
    %c0_i32_0 = arith.constant 0 : i32
    %c0_i32_1 = arith.constant 0 : i32
    return %c0_i32, %c0_i32_0 : i32, i32
  }
  func.func @transform_10(%arg0: i32) -> (i32, i32) {
    %c0_i32 = arith.constant 0 : i32
    %c0_i32_0 = arith.constant 0 : i32
    %c0_i32_1 = arith.constant 0 : i32
    return %c0_i32, %c0_i32_0 : i32, i32
  }
  func.func @transform_11(%arg0: i32) -> (i32, i32) {
    %c0_i32 = arith.constant 0 : i32
    %c0_i32_0 = arith.constant 0 : i32
    return %arg0, %c0_i32 : i32, i32
  }
  func.func @transform_12(%arg0: i32) -> (i32, i32) {
    %c0_i32 = arith.constant 0 : i32
    %c0_i32_0 = arith.constant 0 : i32
    return %arg0, %c0_i32 : i32, i32
  }
}

</mosaic_0001>

<llo_original>
// kernel: tpu_custom_call.1
$region0: #{tpu_custom_call.1}
  #allocation0 [shape = 'u32[]', space=smem, size = 0x4, offset = 0x4, fixed_abs, tag = 'smem constant byte address 0x4 - core index']
  #allocation1 [shape = 'u32[144,128]{1,0:T(1,128)}', space=vmem, size = 0x12000, scoped, tag = 'internal scratch']
  %s0 = inlined_call_operand.vmem [shape: bf16[16,16], index: 0, kind: input, shape index: {}]
  %s1 = inlined_call_operand.vmem [shape: bf16[16,128], index: 1, kind: input, shape index: {}]
  %s2 = inlined_call_operand.vmem [shape: s32[16,1], index: 2, kind: input, shape index: {}]
  %s3 = inlined_call_operand.vmem [shape: s32[16,1], index: 3, kind: input, shape index: {}]
  %s4 = inlined_call_operand.vmem [shape: f32[16,1], index: 4, kind: input, shape index: {}]
  %s5 = inlined_call_operand.vmem [shape: bf16[16,128], index: 5, kind: input, shape index: {}]
  %s6 = inlined_call_operand.vmem [shape: bf16[128,128], index: 6, kind: input, shape index: {}]
  %s7 = inlined_call_operand.vmem [shape: bf16[4,128], index: 7, kind: input, shape index: {}]
  %s8 = inlined_call_operand.vmem [shape: f32[1,128], index: 8, kind: input, shape index: {}]
  %s9 = inlined_call_operand.vmem [shape: bf16[128,5], index: 9, kind: input, shape index: {}]
  %s10 = inlined_call_operand.vmem [shape: f32[1,5], index: 10, kind: input, shape index: {}]
  %s11 = inlined_call_operand.hbm [shape: f32[16,128], index: 11, kind: output, shape index: {0}]
  %s12 = inlined_call_operand.hbm [shape: bf16[16,128], index: 12, kind: output, shape index: {1}]
  %13 = xla_tuple %s11, %s12
  %s14 = sld [smem:[#allocation0]]
  $region62: #{tpu_custom_call.1} parent=0
    _
  %s16 = ssub.s32 1, %s14
  %s17 = scalar_select 0, %s16, %s14
  $region1: #{tpu_custom_call.1} parent=0
    #allocation2 [shape = 'u8[8192]{0}', space=vmem, size = 0x2000, scoped, tag = 'output window, operand 0, single buffered']
    #allocation3 [shape = 's32[1]{0}', space=sflag, size = 0x4, scoped, tag = 'scoped memory for tpu_custom_call.1']
    #allocation4 [shape = 'u8[4096]{0}', space=vmem, size = 0x1000, scoped, tag = 'output window, operand 1, single buffered']
    #allocation5 [shape = 's32[1]{0}', space=sflag, size = 0x4, scoped, tag = 'scoped memory for tpu_custom_call.1']
    %18 = vsyncpa [#allocation3], 0
    %19 = vsyncpa [#allocation5], 0
    // Predicated region
    $region2: #{tpu_custom_call.1} parent=1 // pred_check
      _
    $region3: #{tpu_custom_call.1} parent=1 // pred_check_branch
      %21 = sbr.rel (0) target = $region5
    $region4: #{tpu_custom_call.1} parent=1 // pred_region
      _
    $region5: #{tpu_custom_call.1} parent=1 // pred_fallthru
      _
    // Predicated region
    $region6: #{tpu_custom_call.1} parent=1 // pred_check
      _
    $region7: #{tpu_custom_call.1} parent=1 // pred_check_branch
      %23 = sbr.rel (0) target = $region9
    $region8: #{tpu_custom_call.1} parent=1 // pred_region
      _
    $region9: #{tpu_custom_call.1} parent=1 // pred_fallthru
      _
    // Predicated region
    $region10: #{tpu_custom_call.1} parent=1 // pred_check
      _
    $region11: #{tpu_custom_call.1} parent=1 // pred_check_branch
      %25 = sbr.rel (0) target = $region13
    $region12: #{tpu_custom_call.1} parent=1 // pred_region
      _
    $region13: #{tpu_custom_call.1} parent=1 // pred_fallthru
      _
    // Predicated region
    $region14: #{tpu_custom_call.1} parent=1 // pred_check
      _
    $region15: #{tpu_custom_call.1} parent=1 // pred_check_branch
      %27 = sbr.rel (0) target = $region17
    $region16: #{tpu_custom_call.1} parent=1 // pred_region
      _
    $region17: #{tpu_custom_call.1} parent=1 // pred_fallthru
      _
    // Predicated region
    $region18: #{tpu_custom_call.1} parent=1 // pred_check
      _
    $region19: #{tpu_custom_call.1} parent=1 // pred_check_branch
      %29 = sbr.rel (0) target = $region21
    $region20: #{tpu_custom_call.1} parent=1 // pred_region
      _
    $region21: #{tpu_custom_call.1} parent=1 // pred_fallthru
      _
    // Predicated region
    $region22: #{tpu_custom_call.1} parent=1 // pred_check
      _
    $region23: #{tpu_custom_call.1} parent=1 // pred_check_branch
      %31 = sbr.rel (0) target = $region25
    $region24: #{tpu_custom_call.1} parent=1 // pred_region
      _
    $region25: #{tpu_custom_call.1} parent=1 // pred_fallthru
      _
    // Predicated region
    $region26: #{tpu_custom_call.1} parent=1 // pred_check
      _
    $region27: #{tpu_custom_call.1} parent=1 // pred_check_branch
      %33 = sbr.rel (0) target = $region29
    $region28: #{tpu_custom_call.1} parent=1 // pred_region
      _
    $region29: #{tpu_custom_call.1} parent=1 // pred_fallthru
      _
    // Predicated region
    $region30: #{tpu_custom_call.1} parent=1 // pred_check
      _
    $region31: #{tpu_custom_call.1} parent=1 // pred_check_branch
      %35 = sbr.rel (0) target = $region33
    $region32: #{tpu_custom_call.1} parent=1 // pred_region
      _
    $region33: #{tpu_custom_call.1} parent=1 // pred_fallthru
      _
    // Predicated region
    $region34: #{tpu_custom_call.1} parent=1 // pred_check
      _
    $region35: #{tpu_custom_call.1} parent=1 // pred_check_branch
      %37 = sbr.rel (0) target = $region37
    $region36: #{tpu_custom_call.1} parent=1 // pred_region
      _
    $region37: #{tpu_custom_call.1} parent=1 // pred_fallthru
      _
    // Predicated region
    $region38: #{tpu_custom_call.1} parent=1 // pred_check
      _
    $region39: #{tpu_custom_call.1} parent=1 // pred_check_branch
      %39 = sbr.rel (0) target = $region41
    $region40: #{tpu_custom_call.1} parent=1 // pred_region
      _
    $region41: #{tpu_custom_call.1} parent=1 // pred_fallthru
      _
    // Predicated region
    $region42: #{tpu_custom_call.1} parent=1 // pred_check
      _
    $region43: #{tpu_custom_call.1} parent=1 // pred_check_branch
      %41 = sbr.rel (0) target = $region45
    $region44: #{tpu_custom_call.1} parent=1 // pred_region
      _
    $region45: #{tpu_custom_call.1} parent=1 // pred_fallthru
      _
    %v43 = vld [vmem:[%s4] sm:$0xff]
    %v44 = vld [vmem:[%s4 + $0x8] sm:$0xff]
    %v45 = vld [vmem:[%s1] sm:$0xf]
    %v46 = vld [vmem:[%s1 + $0x4] sm:$0xf]
    %v47 = vunpack.c.l.bf16 %v45
    %v48 = vunpack.c.l.bf16 %v46
    %50 = vset.pattern.permute.xlu0 0
    %51 = vperm.xlu0 %50, %v43
    %v52 = vpop.permute.xlu0 %51
    %55 = vset.pattern.permute.xlu0 0
    %56 = vperm.xlu0 %55, %v44
    %v57 = vpop.permute.xlu0 %56
    %v59 = vmul.f32 %v47, %v52
    %v60 = vmul.f32 %v48, %v57
    %v61 = vpack.c.bf16 %v60, %v59
    %v62 = vlaneseq
    %v63 = vand.u32 %v62, 127
    %v64 = vld [vmem:[%s2] sm:$0xff]
    %v65 = vld [vmem:[%s2 + $0x8] sm:$0xff]
    %66 = vset.pattern.permute.xlu0 0
    %67 = vperm.xlu0 %66, %v64
    %v68 = vpop.permute.xlu0 %67
    %69 = vset.pattern.permute.xlu0 0
    %70 = vperm.xlu0 %69, %v65
    %v71 = vpop.permute.xlu0 %70
    %vm72 = vcmp.eq.s32.totalorder %v63, %v68
    %vm73 = vcmp.eq.s32.totalorder %v63, %v71
    %v74 = vsel %vm72, 1, 0
    %v75 = vsel %vm73, 1, 0
    %v76 = vcvt.s32.f32 %v74
    %v77 = vcvt.s32.f32 %v75
    %v78 = vpack.c.bf16 %v77, %v76
    %v79 = vld [vmem:[%s0] sm:$0xf]
    %v80 = vld [vmem:[%s0 + $0x4] sm:$0xf]
    %v81 = vld [vmem:[%s5] sm:$0xf]
    %v82 = vld [vmem:[%s5 + $0x4] sm:$0xf]
    %v83 = vld [vmem:[%s6] sm:$0xf]
    %v84 = vld [vmem:[%s6 + $0x4] sm:$0xf]
    %v85 = vld [vmem:[%s6 + $0x8] sm:$0xf]
    %v86 = vld [vmem:[%s6 + $0xc] sm:$0xf]
    %v87 = vld [vmem:[%s6 + $0x10] sm:$0xf]
    %v88 = vld [vmem:[%s6 + $0x14] sm:$0xf]
    %v89 = vld [vmem:[%s6 + $0x18] sm:$0xf]
    %v90 = vld [vmem:[%s6 + $0x1c] sm:$0xf]
    %v91 = vld [vmem:[%s6 + $0x20] sm:$0xf]
    %v92 = vld [vmem:[%s6 + $0x24] sm:$0xf]
    %v93 = vld [vmem:[%s6 + $0x28] sm:$0xf]
    %v94 = vld [vmem:[%s6 + $0x2c] sm:$0xf]
    %v95 = vld [vmem:[%s6 + $0x30] sm:$0xf]
    %v96 = vld [vmem:[%s6 + $0x34] sm:$0xf]
    %v97 = vld [vmem:[%s6 + $0x38] sm:$0xf]
    %v98 = vld [vmem:[%s6 + $0x3c] sm:$0xf]
    %v115 = vunpack.c.l.b16 %v83
    %v116 = vunpack.c.l.b16 %v84
    %v117 = vunpack.c.l.b16 %v85
    %v118 = vunpack.c.l.b16 %v86
    %v119 = vunpack.c.l.b16 %v87
    %v120 = vunpack.c.l.b16 %v88
    %v121 = vunpack.c.l.b16 %v89
    %v122 = vunpack.c.l.b16 %v90
    %v123 = vunpack.c.l.b16 %v91
    %v124 = vunpack.c.l.b16 %v92
    %v125 = vunpack.c.l.b16 %v93
    %v126 = vunpack.c.l.b16 %v94
    %v127 = vunpack.c.l.b16 %v95
    %v128 = vunpack.c.l.b16 %v96
    %v129 = vunpack.c.l.b16 %v97
    %v130 = vunpack.c.l.b16 %v98
    %v131 = vpack.c.b16 %v116, %v115
    %v132 = vpack.c.b16 %v118, %v117
    %v133 = vpack.c.b16 %v120, %v119
    %v134 = vpack.c.b16 %v122, %v121
    %v135 = vpack.c.b16 %v124, %v123
    %v136 = vpack.c.b16 %v126, %v125
    %v137 = vpack.c.b16 %v128, %v127
    %v138 = vpack.c.b16 %v130, %v129
    %147 = vmatprep.subr.bf16.mxu0 0
    %148 = vmatpush1.bf16.msra.mxu0 %v131
    %149 = vmatprep.subr.bf16.mxu0 0
    %150 = vmatpush1.bf16.msra.mxu0 %v132
    %151 = vmatprep.subr.bf16.mxu0 0
    %152 = vmatpush1.bf16.msra.mxu0 %v133
    %153 = vmatprep.subr.bf16.mxu0 0
    %154 = vmatpush1.bf16.msra.mxu0 %v134
    %155 = vmatprep.subr.bf16.mxu0 0
    %156 = vmatpush1.bf16.msra.mxu0 %v135
    %157 = vmatprep.subr.bf16.mxu0 0
    %158 = vmatpush1.bf16.msra.mxu0 %v136
    %159 = vmatprep.subr.bf16.mxu0 0
    %160 = vmatpush1.bf16.msra.mxu0 %v137
    %161 = vmatprep.subr.bf16.mxu0 0
    %162 = vmatpush1.bf16.msra.mxu0 %v138
    %163 = vmatprep.subr.bf16.mxu0 0
    %164 = vmatpush1.bf16.msra.mxu0 0
    %165 = vmatprep.subr.bf16.mxu0 0
    %166 = vmatpush1.bf16.msra.mxu0 0
    %167 = vmatprep.subr.bf16.mxu0 0
    %168 = vmatpush1.bf16.msra.mxu0 0
    %169 = vmatprep.subr.bf16.mxu0 0
    %170 = vmatpush1.bf16.msra.mxu0 0
    %171 = vmatprep.subr.bf16.mxu0 0
    %172 = vmatpush1.bf16.msra.mxu0 0
    %173 = vmatprep.subr.bf16.mxu0 0
    %174 = vmatpush1.bf16.msra.mxu0 0
    %175 = vmatprep.subr.bf16.mxu0 0
    %176 = vmatpush1.bf16.msra.mxu0 0
    %177 = vmatprep.subr.bf16.mxu0 0
    %178 = vmatpush1.bf16.msra.mxu0 0
    %179 = vmatprep.mubr.bf16.mxu0 0
    %180 = vmatmul.mubr.bf16.gmra.mrb[0].mxu0 %v61
    %v181 = vpop.f32.mrb[0].mxu0
    %v182 = vadd.f32 0.0, %v181
    %v183 = vpop.f32.mrb[0].mxu0
    %v184 = vpop.f32.mrb[0].mxu0
    %v185 = vadd.f32 0.0, %v184
    %v186 = vpop.f32.mrb[0].mxu0
    %187 = vdwg.mxu0
    %v190 = vunpack.c.l.b16 %v79
    %v191 = vunpack.c.l.b16 %v80
    %v192 = vpack.c.b16 %v191, %v190
    %v195 = vunpack.c.l.b16 %v81
    %v196 = vunpack.c.l.b16 %v82
    %v197 = vpack.c.b16 %v196, %v195
    %vm199 = vcmask 130048
    %v201 = vsel %vm199, %v192, 0
    %203 = vmatprep.subr.bf16.mxu0 0
    %204 = vmatpush1.bf16.msra.mxu0 %v197
    %205 = vmatprep.subr.bf16.mxu0 0
    %206 = vmatpush1.bf16.msra.mxu0 0
    %207 = vmatprep.subr.bf16.mxu0 0
    %208 = vmatpush1.bf16.msra.mxu0 0
    %209 = vmatprep.subr.bf16.mxu0 0
    %210 = vmatpush1.bf16.msra.mxu0 0
    %211 = vmatprep.subr.bf16.mxu0 0
    %212 = vmatpush1.bf16.msra.mxu0 0
    %213 = vmatprep.subr.bf16.mxu0 0
    %214 = vmatpush1.bf16.msra.mxu0 0
    %215 = vmatprep.subr.bf16.mxu0 0
    %216 = vmatpush1.bf16.msra.mxu0 0
    %217 = vmatprep.subr.bf16.mxu0 0
    %218 = vmatpush1.bf16.msra.mxu0 0
    %219 = vmatprep.subr.bf16.mxu0 0
    %220 = vmatpush1.bf16.msra.mxu0 0
    %221 = vmatprep.subr.bf16.mxu0 0
    %222 = vmatpush1.bf16.msra.mxu0 0
    %223 = vmatprep.subr.bf16.mxu0 0
    %224 = vmatpush1.bf16.msra.mxu0 0
    %225 = vmatprep.subr.bf16.mxu0 0
    %226 = vmatpush1.bf16.msra.mxu0 0
    %227 = vmatprep.subr.bf16.mxu0 0
    %228 = vmatpush1.bf16.msra.mxu0 0
    %229 = vmatprep.subr.bf16.mxu0 0
    %230 = vmatpush1.bf16.msra.mxu0 0
    %231 = vmatprep.subr.bf16.mxu0 0
    %232 = vmatpush1.bf16.msra.mxu0 0
    %233 = vmatprep.subr.bf16.mxu0 0
    %234 = vmatpush1.bf16.msra.mxu0 0
    %235 = vmatprep.mubr.bf16.mxu0 0
    %236 = vmatmul.mubr.bf16.gmra.mrb[0].mxu0 %v201
    %v237 = vpop.f32.mrb[0].mxu0
    %v238 = vadd.f32 %v182, %v237
    %v239 = vpop.f32.mrb[0].mxu0
    %v240 = vpop.f32.mrb[0].mxu0
    %v241 = vadd.f32 %v185, %v240
    %v242 = vpop.f32.mrb[0].mxu0
    %243 = vdwg.mxu0
    %v244 = vld [vmem:[%s7] sm:$0x3]
    %vm245 = vcmask 31744
    %v247 = vsel %vm245, %v78, 0
    %vm249 = vcmask 1041408
    %v251 = vsel %vm249, %v244, 0
    %253 = vmatprep.subr.bf16.mxu0 0
    %254 = vmatpush1.bf16.msra.mxu0 %v251
    %255 = vmatprep.subr.bf16.mxu0 0
    %256 = vmatpush1.bf16.msra.mxu0 0
    %257 = vmatprep.subr.bf16.mxu0 0
    %258 = vmatpush1.bf16.msra.mxu0 0
    %259 = vmatprep.subr.bf16.mxu0 0
    %260 = vmatpush1.bf16.msra.mxu0 0
    %261 = vmatprep.subr.bf16.mxu0 0
    %262 = vmatpush1.bf16.msra.mxu0 0
    %263 = vmatprep.subr.bf16.mxu0 0
    %264 = vmatpush1.bf16.msra.mxu0 0
    %265 = vmatprep.subr.bf16.mxu0 0
    %266 = vmatpush1.bf16.msra.mxu0 0
    %267 = vmatprep.subr.bf16.mxu0 0
    %268 = vmatpush1.bf16.msra.mxu0 0
    %269 = vmatprep.subr.bf16.mxu0 0
    %270 = vmatpush1.bf16.msra.mxu0 0
    %271 = vmatprep.subr.bf16.mxu0 0
    %272 = vmatpush1.bf16.msra.mxu0 0
    %273 = vmatprep.subr.bf16.mxu0 0
    %274 = vmatpush1.bf16.msra.mxu0 0
    %275 = vmatprep.subr.bf16.mxu0 0
    %276 = vmatpush1.bf16.msra.mxu0 0
    %277 = vmatprep.subr.bf16.mxu0 0
    %278 = vmatpush1.bf16.msra.mxu0 0
    %279 = vmatprep.subr.bf16.mxu0 0
    %280 = vmatpush1.bf16.msra.mxu0 0
    %281 = vmatprep.subr.bf16.mxu0 0
    %282 = vmatpush1.bf16.msra.mxu0 0
    %283 = vmatprep.subr.bf16.mxu0 0
    %284 = vmatpush1.bf16.msra.mxu0 0
    %285 = vmatprep.mubr.bf16.mxu0 0
    %286 = vmatmul.mubr.bf16.gmra.mrb[0].mxu0 %v247
    %v287 = vpop.f32.mrb[0].mxu0
    %v288 = vadd.f32 0.0, %v287
    %v289 = vpop.f32.mrb[0].mxu0
    %v290 = vpop.f32.mrb[0].mxu0
    %v291 = vadd.f32 0.0, %v290
    %v292 = vpop.f32.mrb[0].mxu0
    %293 = vdwg.mxu0
    %v294 = vadd.f32 %v238, %v288
    %v295 = vadd.f32 %v241, %v291
    %v296 = vld [vmem:[%s8] sm:$0x1]
    %v298 = vlaneseq
    %v299 = vshrl.u32 %v298, 7
    %v300 = vsub.s32 0, %v299
    %v301 = vrot.slane %v296, %v300
    %v303 = vadd.f32 %v294, %v301
    %v304 = vadd.f32 %v295, %v301
    %v305 = vtanh.pop %v303
    %v306 = vtanh.pop %v304
    %v307 = vpack.c.bf16 %v306, %v305
    %v309 = vunpack.c.l.b16 %v307
    %v310 = vunpack.c.h.b16 %v307
    %v311 = vpack.c.b16 %v309, %v309
    %v312 = vpack.c.b16 %v310, %v310
    %315 = vst [vmem:[#allocation4] sm:$0xf] %v311
    %316 = vst [vmem:[#allocation4 + $0x4] sm:$0xf] %v312
    %v317 = vld [vmem:[%s9] sm:$0xf]
    %v318 = vld [vmem:[%s9 + $0x4] sm:$0xf]
    %v319 = vld [vmem:[%s9 + $0x8] sm:$0xf]
    %v320 = vld [vmem:[%s9 + $0xc] sm:$0xf]
    %v321 = vld [vmem:[%s9 + $0x10] sm:$0xf]
    %v322 = vld [vmem:[%s9 + $0x14] sm:$0xf]
    %v323 = vld [vmem:[%s9 + $0x18] sm:$0xf]
    %v324 = vld [vmem:[%s9 + $0x1c] sm:$0xf]
    %v325 = vld [vmem:[%s9 + $0x20] sm:$0xf]
    %v326 = vld [vmem:[%s9 + $0x24] sm:$0xf]
    %v327 = vld [vmem:[%s9 + $0x28] sm:$0xf]
    %v328 = vld [vmem:[%s9 + $0x2c] sm:$0xf]
    %v329 = vld [vmem:[%s9 + $0x30] sm:$0xf]
    %v330 = vld [vmem:[%s9 + $0x34] sm:$0xf]
    %v331 = vld [vmem:[%s9 + $0x38] sm:$0xf]
    %v332 = vld [vmem:[%s9 + $0x3c] sm:$0xf]
    %v333 = vld [vmem:[%s10] sm:$0x1]
    %v335 = vlaneseq
    %v336 = vshrl.u32 %v335, 7
    %v337 = vsub.s32 0, %v336
    %v338 = vrot.slane %v333, %v337
    %v356 = vunpack.c.l.b16 %v317
    %v357 = vunpack.c.l.b16 %v318
    %v358 = vunpack.c.l.b16 %v319
    %v359 = vunpack.c.l.b16 %v320
    %v360 = vunpack.c.l.b16 %v321
    %v361 = vunpack.c.l.b16 %v322
    %v362 = vunpack.c.l.b16 %v323
    %v363 = vunpack.c.l.b16 %v324
    %v364 = vunpack.c.l.b16 %v325
    %v365 = vunpack.c.l.b16 %v326
    %v366 = vunpack.c.l.b16 %v327
    %v367 = vunpack.c.l.b16 %v328
    %v368 = vunpack.c.l.b16 %v329
    %v369 = vunpack.c.l.b16 %v330
    %v370 = vunpack.c.l.b16 %v331
    %v371 = vunpack.c.l.b16 %v332
    %v372 = vpack.c.b16 %v357, %v356
    %v373 = vpack.c.b16 %v359, %v358
    %v374 = vpack.c.b16 %v361, %v360
    %v375 = vpack.c.b16 %v363, %v362
    %v376 = vpack.c.b16 %v365, %v364
    %v377 = vpack.c.b16 %v367, %v366
    %v378 = vpack.c.b16 %v369, %v368
    %v379 = vpack.c.b16 %v371, %v370
    %388 = vmatprep.subr.bf16.mxu0 0
    %389 = vmatpush1.bf16.msra.mxu0 %v372
    %390 = vmatprep.subr.bf16.mxu0 0
    %391 = vmatpush1.bf16.msra.mxu0 %v373
    %392 = vmatprep.subr.bf16.mxu0 0
    %393 = vmatpush1.bf16.msra.mxu0 %v374
    %394 = vmatprep.subr.bf16.mxu0 0
    %395 = vmatpush1.bf16.msra.mxu0 %v375
    %396 = vmatprep.subr.bf16.mxu0 0
    %397 = vmatpush1.bf16.msra.mxu0 %v376
    %398 = vmatprep.subr.bf16.mxu0 0
    %399 = vmatpush1.bf16.msra.mxu0 %v377
    %400 = vmatprep.subr.bf16.mxu0 0
    %401 = vmatpush1.bf16.msra.mxu0 %v378
    %402 = vmatprep.subr.bf16.mxu0 0
    %403 = vmatpush1.bf16.msra.mxu0 %v379
    %404 = vmatprep.subr.bf16.mxu0 0
    %405 = vmatpush1.bf16.msra.mxu0 0
    %406 = vmatprep.subr.bf16.mxu0 0
    %407 = vmatpush1.bf16.msra.mxu0 0
    %408 = vmatprep.subr.bf16.mxu0 0
    %409 = vmatpush1.bf16.msra.mxu0 0
    %410 = vmatprep.subr.bf16.mxu0 0
    %411 = vmatpush1.bf16.msra.mxu0 0
    %412 = vmatprep.subr.bf16.mxu0 0
    %413 = vmatpush1.bf16.msra.mxu0 0
    %414 = vmatprep.subr.bf16.mxu0 0
    %415 = vmatpush1.bf16.msra.mxu0 0
    %416 = vmatprep.subr.bf16.mxu0 0
    %417 = vmatpush1.bf16.msra.mxu0 0
    %418 = vmatprep.subr.bf16.mxu0 0
    %419 = vmatpush1.bf16.msra.mxu0 0
    %420 = vmatprep.mubr.bf16.mxu0 0
    %421 = vmatmul.mubr.bf16.gmra.mrb[0].mxu0 %v307
    %v422 = vpop.f32.mrb[0].mxu0
    %v423 = vadd.f32 %v338, %v422
    %v424 = vpop.f32.mrb[0].mxu0
    %v425 = vpop.f32.mrb[0].mxu0
    %v426 = vadd.f32 %v338, %v425
    %v427 = vpop.f32.mrb[0].mxu0
    %428 = vdwg.mxu0
    %v429 = vsel %vm245, %v423, -inf
    %430 = vmax.xlane.f32.xlu0 %v429
    %v431 = vpop.xlane.xlu0 %430
    %v432 = vsel %vm245, %v426, -inf
    %433 = vmax.xlane.f32.xlu0 %v432
    %v434 = vpop.xlane.xlu0 %433
    %v435 = vsub.f32 %v423, %v431
    %v436 = vsub.f32 %v426, %v434
    %v437 = vmul.f32 %v435, 1.442695
    %v438 = vpow.pop %v437
    %v439 = vmul.f32 %v436, 1.442695
    %v440 = vpow.pop %v439
    %v441 = vsel %vm245, %v438, 0.0
    %442 = vadd.xlane.f32.xlu0 %v441
    %v443 = vpop.xlane.xlu0 %442
    %v444 = vsel %vm245, %v440, 0.0
    %445 = vadd.xlane.f32.xlu0 %v444
    %v446 = vpop.xlane.xlu0 %445
    %v447 = vlog2.pop %v443
    %v448 = vmul.f32 %v447, 0.6931472
    %v449 = vlog2.pop %v446
    %v450 = vmul.f32 %v449, 0.6931472
    %v451 = vsub.f32 %v435, %v448
    %v452 = vsub.f32 %v436, %v450
    %v453 = vrcp.pop %v443
    %v454 = vrcp.pop %v446
    %v455 = vmul.f32 %v438, %v453
    %v456 = vmul.f32 %v440, %v454
    %vm457 = vcmp.eq.f32.partialorder %v423, %v431
    %vm458 = vcmp.eq.f32.partialorder %v426, %v434
    %v459 = vsel %vm457, %v63, 4
    %v460 = vsel %vm458, %v63, 4
    %v461 = vsel %vm245, %v459, 2147483647
    %v462 = vand.u32 %v461, 65535
    %v463 = vshra.s32 %v461, 16
    %v464 = vcvt.s32.f32 %v462
    %v465 = vcvt.s32.f32 %v463
    %466 = vmin.xlane.f32.xlu0 %v465
    %v467 = vpop.xlane.xlu0 %466
    %vm468 = vcmp.eq.f32.partialorder %v465, %v467
    %v469 = vsel %vm468, %v464, inf
    %470 = vmin.xlane.f32.xlu0 %v469
    %v471 = vpop.xlane.xlu0 %470
    %v472 = vcvt.f32.s32 %v471
    %v473 = vcvt.f32.s32 %v467
    %v474 = vshll.u32 %v473, 16
    %v475 = vadd.s32 %v474, %v472
    %v476 = vsel %vm245, %v460, 2147483647
    %v477 = vand.u32 %v476, 65535
    %v478 = vshra.s32 %v476, 16
    %v479 = vcvt.s32.f32 %v477
    %v480 = vcvt.s32.f32 %v478
    %481 = vmin.xlane.f32.xlu0 %v480
    %v482 = vpop.xlane.xlu0 %481
    %vm483 = vcmp.eq.f32.partialorder %v480, %v482
    %v484 = vsel %vm483, %v479, inf
    %485 = vmin.xlane.f32.xlu0 %v484
    %v486 = vpop.xlane.xlu0 %485
    %v487 = vcvt.f32.s32 %v486
    %v488 = vcvt.f32.s32 %v482
    %v489 = vshll.u32 %v488, 16
    %v490 = vadd.s32 %v489, %v487
    %v491 = vcvt.s32.f32 %v475
    %v492 = vcvt.s32.f32 %v490
    %vm493 = vcmp.eq.s32.totalorder %v63, %v475
    %vm494 = vcmp.eq.s32.totalorder %v63, %v490
    %v495 = vsel %vm493, %v451, 0.0
    %v496 = vsel %vm494, %v452, 0.0
    %v497 = vsel %vm245, %v495, 0.0
    %498 = vadd.xlane.f32.xlu0 %v497
    %v499 = vpop.xlane.xlu0 %498
    %v500 = vsel %vm245, %v496, 0.0
    %501 = vadd.xlane.f32.xlu0 %v500
    %v502 = vpop.xlane.xlu0 %501
    %v503 = vld [vmem:[%s3] sm:$0xff]
    %v504 = vld [vmem:[%s3 + $0x8] sm:$0xff]
    %505 = vset.pattern.permute.xlu0 0
    %506 = vperm.xlu0 %505, %v503
    %v507 = vpop.permute.xlu0 %506
    %508 = vset.pattern.permute.xlu0 0
    %509 = vperm.xlu0 %508, %v504
    %v510 = vpop.permute.xlu0 %509
    %vm511 = vcmp.eq.s32.totalorder %v63, %v507
    %vm512 = vcmp.eq.s32.totalorder %v63, %v510
    %v513 = vsel %vm511, %v451, 0.0
    %v514 = vsel %vm512, %v452, 0.0
    %v515 = vsel %vm245, %v513, 0.0
    %516 = vadd.xlane.f32.xlu0 %v515
    %v517 = vpop.xlane.xlu0 %516
    %v518 = vsel %vm245, %v514, 0.0
    %519 = vadd.xlane.f32.xlu0 %v518
    %v520 = vpop.xlane.xlu0 %519
    %v521 = vmul.f32 %v455, %v451
    %v522 = vmul.f32 %v456, %v452
    %v523 = vsel %vm245, %v521, 0.0
    %524 = vadd.xlane.f32.xlu0 %v523
    %v525 = vpop.xlane.xlu0 %524
    %v526 = vsel %vm245, %v522, 0.0
    %527 = vadd.xlane.f32.xlu0 %v526
    %v528 = vpop.xlane.xlu0 %527
    %v529 = vsub.f32 0.0, %v525
    %v530 = vsub.f32 0.0, %v528
    %vm531 = vcmp.eq.s32.totalorder %v63, 0
    %533 = vset.pattern.permute.xlu0 4
    %534 = vperm.xlu0 %533, %v423
    %v535 = vpop.permute.xlu0 %534
    %538 = vset.pattern.permute.xlu0 4
    %539 = vperm.xlu0 %538, %v426
    %v540 = vpop.permute.xlu0 %539
    %v542 = vsel %vm531, %v535, 0.0
    %v543 = vsel %vm531, %v540, 0.0
    %vm544 = vcmp.eq.s32.totalorder %v63, 1
    %v545 = vsel %vm544, %v499, 0.0
    %v546 = vsel %vm544, %v502, 0.0
    %v547 = vadd.f32 %v542, %v545
    %v548 = vadd.f32 %v543, %v546
    %vm549 = vcmp.eq.s32.totalorder %v63, 2
    %v550 = vsel %vm549, %v491, 0.0
    %v551 = vsel %vm549, %v492, 0.0
    %v552 = vadd.f32 %v547, %v550
    %v553 = vadd.f32 %v548, %v551
    %vm554 = vcmp.eq.s32.totalorder %v63, 3
    %v555 = vsel %vm554, %v529, 0.0
    %v556 = vsel %vm554, %v530, 0.0
    %v557 = vadd.f32 %v552, %v555
    %v558 = vadd.f32 %v553, %v556
    %vm559 = vcmp.eq.s32.totalorder %v63, 4
    %v560 = vsel %vm559, %v517, 0.0
    %v561 = vsel %vm559, %v520, 0.0
    %v562 = vadd.f32 %v557, %v560
    %v563 = vadd.f32 %v558, %v561
    %564 = vst [vmem:[#allocation2] sm:$0xff] %v562
    %565 = vst [vmem:[#allocation2 + $0x8] sm:$0xff] %v563
    // Predicated region
    $region46: #{tpu_custom_call.1} parent=1 // pred_check
      _
    $region47: #{tpu_custom_call.1} parent=1 // pred_check_branch
      %567 = sbr.rel (0) target = $region49
    $region48: #{tpu_custom_call.1} parent=1 // pred_region
      %s569 = ssub.s32 256, 256
      %570 = vsyncadd [#allocation3], %s569
      %s571 = sshll.u32 [#allocation2], 4
      %s572 = int_to_ptr.vmem [resolvable:$true] %s571
      %577 = dma.vmem_to_hbm [thread:$0]  %s572, 256, %s11, [#allocation3], 128, 128, 8
    $region49: #{tpu_custom_call.1} parent=1 // pred_fallthru
      _
    // Predicated region
    $region50: #{tpu_custom_call.1} parent=1 // pred_check
      _
    $region51: #{tpu_custom_call.1} parent=1 // pred_check_branch
      %579 = sbr.rel (0) target = $region53
    $region52: #{tpu_custom_call.1} parent=1 // pred_region
      %s581 = ssub.s32 128, 128
      %582 = vsyncadd [#allocation5], %s581
      %s583 = sshll.u32 [#allocation4], 4
      %s584 = int_to_ptr.vmem [resolvable:$true] %s583
      %589 = dma.vmem_to_hbm [thread:$0]  %s584, 128, %s12, [#allocation5], 64, 64, 4
    $region53: #{tpu_custom_call.1} parent=1 // pred_fallthru
      _
    // Predicated region
    $region54: #{tpu_custom_call.1} parent=1 // pred_check
      _
    $region55: #{tpu_custom_call.1} parent=1 // pred_check_branch
      %591 = sbr.rel (0) target = $region57
    $region56: #{tpu_custom_call.1} parent=1 // pred_region
      %592 = dma.done [#allocation3], 256
    $region57: #{tpu_custom_call.1} parent=1 // pred_fallthru
      _
    // Predicated region
    $region58: #{tpu_custom_call.1} parent=1 // pred_check
      _
    $region59: #{tpu_custom_call.1} parent=1 // pred_check_branch
      %594 = sbr.rel (0) target = $region61
    $region60: #{tpu_custom_call.1} parent=1 // pred_region
      %595 = dma.done [#allocation5], 128
    $region61: #{tpu_custom_call.1} parent=1 // pred_fallthru
      _
    %596 = vsyncpa [#allocation3], 1
    %597 = vsyncpa [#allocation5], 1

</llo_original>
